<compile_context>
chip_gen: v6e
topology: v6e:2x2x1
jax: 0.10.0
libtpu: 0.0.40
codegen_flags: <defaults>
</compile_context>

<pallas_src>
import functools
import math

import jax
import jax.numpy as jnp
from jax.experimental import pallas as pl
from jax.experimental.pallas import tpu as pltpu


def _round_up(n, m):
    return ((n + m - 1) // m) * m


def _vmem_capacity_bytes():
    try:
        info = pltpu.get_tpu_info()
        cap = getattr(info, "vmem_capacity_bytes", None)
        if cap:
            return int(cap)
    except Exception:
        pass
    return 64 << 20   # conservative default: v7x per-TC physical VMEM


def _hebb_linear_kernel(x_ref, wb_ref, dw_ref, db_ref, o_ref, acc_ref, *, activation):
    """One grid step: tb batch samples x one tk-slice of the ind reduction.

    x_ref  : (tb, tk)          input dtype  -- streamed
    wb_ref : (tk, outd)        bf16         -- shared base weight slice
    dw_ref : (tb, tk, outd)    bf16         -- per-sample plastic delta slice
    db_ref : (tb, outd)        f32          -- per-sample bias (b_base folded in)
    o_ref  : (tb, outd)        out dtype    -- resident across the k axis
    acc_ref: (tb, outd)        f32 scratch  -- accumulator across the k axis
    """
    k = pl.program_id(1)

    @pl.when(k == 0)
    def _init():
        acc_ref[...] = jnp.zeros_like(acc_ref)

    x = x_ref[...].astype(jnp.float32)                              # (tb, tk)

    # Shared base weight: single bf16 MXU pass, f32 accumulate.
    base = jnp.dot(x.astype(jnp.bfloat16), wb_ref[...],
                   preferred_element_type=jnp.float32)              # (tb, outd)

    # Per-sample plastic contribution on VPU/XLU:
    #   plastic[b, o] = sum_k x[b, k] * dw[b, k, o]
    plastic = jnp.sum(x[:, :, None] * dw_ref[...].astype(jnp.float32), axis=1)

    acc_ref[...] += base + plastic

    @pl.when(k == pl.num_programs(1) - 1)
    def _finish():
        out = acc_ref[...] + db_ref[...].astype(jnp.float32)
        if activation == "relu":
            out = jnp.maximum(out, 0.0)
        elif activation == "tanh":
            out = jnp.tanh(out)
        elif activation == "sigmoid":
            out = jax.nn.sigmoid(out)
        # 'none' -> identity (HebbLinear default).
        o_ref[...] = out.astype(o_ref.dtype)


def hebb_linear(x, w_base, dw, b_base, db, *, activation="none", tb=None, tk=None):
    """out[i] = act(x[i] @ (w_base + dw[i]) + b_base + db[i]).

    Matches HebbLinear.forward (torch.baddbmm with per-sample plastic weights).
    NOTE: the final cast to x.dtype drops f32 accumulator precision if x is
    bf16 (matches the PyTorch module's output-dtype behaviour).
    """
    B, ind = x.shape
    ind_w, outd = w_base.shape
    assert ind_w == ind
    assert dw.shape == (B, ind, outd)
    assert db.shape == (B, outd)
    assert b_base.shape == (outd,)

    out_dtype = x.dtype
    out_isz = jnp.dtype(out_dtype).itemsize
    x_isz = jnp.dtype(x.dtype).itemsize

    # ---- Tile sizes --------------------------------------------------------
    # Lane-dense output / dw last dim.
    outd_p = _round_up(outd, 128)
    # ind reduction tile: multiple of 16 (bf16 sublane packing); capped so the
    # in-kernel f32 temporaries (tb, tk, outd) stay bounded.
    if tk is None:
        tk = min(_round_up(ind, 16), 256)
    ind_p = _round_up(ind, tk)

    phys_vmem = _vmem_capacity_bytes()
    budget = int(phys_vmem * 0.75)

    if tb is None:
        # Bytes that scale with tb: double-buffered streamed blocks plus the
        # in-kernel f32 upcast/product temporaries plus the accumulator.
        per_tb = (tk * outd_p * (2 * 2 + 2 * 4)     # dw bf16 (x2 buf) + f32 temps
                  + 2 * tk * x_isz                  # x block
                  + 2 * outd_p * 4                  # db block
                  + 2 * outd_p * out_isz            # out block
                  + outd_p * 4)                     # f32 accumulator scratch
        fixed = 2 * tk * outd_p * 2 + (2 << 20)     # resident w_base blocks + slack
        tb = max(8, min(512, (budget - fixed) // max(per_tb, 1)))
        tb = (tb // 8) * 8
        # Keep >= ~8 grid steps on the parallel batch axis when the batch
        # allows it (v7x megacore load balance).
        tb = min(tb, max(8, _round_up(-(-B // 8), 8)))
    tb = max(8, (tb // 8) * 8)
    B_p = _round_up(B, tb)

    # ---- Host-side prep: pad to tile multiples, fold bias, bf16 w_base ------
    x_p = jnp.pad(x, ((0, B_p - B), (0, ind_p - ind)))
    w_p = jnp.pad(w_base, ((0, ind_p - ind), (0, outd_p - outd))).astype(jnp.bfloat16)
    dw_p = jnp.pad(dw.astype(jnp.bfloat16),
                   ((0, B_p - B), (0, ind_p - ind), (0, outd_p - outd)))
    db_eff = db.astype(jnp.float32) + b_base.astype(jnp.float32)[None, :]
    db_p = jnp.pad(db_eff, ((0, B_p - B), (0, outd_p - outd)))

    grid = (B_p // tb, ind_p // tk)

    # ---- VMEM accounting (includes the in-kernel f32 temps; never exceeds
    # the physical per-TC budget) ---------------------------------------------
    vmem_est = (2 * tb * tk * outd_p * 2        # dw block, double buffered (bf16)
                + 2 * tb * tk * outd_p * 4      # f32 upcast + product temporaries
                + 2 * tb * tk * x_isz           # x block
                + 2 * tk * outd_p * 2           # w_base block (bf16)
                + 2 * tb * outd_p * 4           # db block
                + 2 * tb * outd_p * out_isz     # out block
                + tb * outd_p * 4               # accumulator scratch
                + (2 << 20))
    vmem_limit = int(min(max(vmem_est, 32 << 20), int(phys_vmem * 0.9)))

    kernel = functools.partial(_hebb_linear_kernel, activation=activation)

    out_p = pl.pallas_call(
        kernel,
        out_shape=jax.ShapeDtypeStruct((B_p, outd_p), out_dtype),
        grid_spec=pltpu.PrefetchScalarGridSpec(
            num_scalar_prefetch=0,
            grid=grid,
            in_specs=[
                pl.BlockSpec((tb, tk), lambda i, k: (i, k)),             # x
                pl.BlockSpec((tk, outd_p), lambda i, k: (k, 0)),         # w_base (bf16)
                pl.BlockSpec((tb, tk, outd_p), lambda i, k: (i, k, 0)),  # dw (bf16)
                pl.BlockSpec((tb, outd_p), lambda i, k: (i, 0)),         # db (+ b_base)
            ],
            out_specs=pl.BlockSpec((tb, outd_p), lambda i, k: (i, 0)),   # lane-dense out
            scratch_shapes=[pltpu.VMEM((tb, outd_p), jnp.float32)],
        ),
        compiler_params=pltpu.CompilerParams(
            dimension_semantics=("parallel", "arbitrary"),
            vmem_limit_bytes=vmem_limit,
        ),
    )(x_p, w_p, dw_p, db_p)

    return out_p[:B, :outd]


def init_hebb_linear_params(key, ind, outd, batch, scale=1.0, fan_in=False):
    """Deterministic stand-in for HebbLinear.__init__ + PlasticParam state."""
    if fan_in:
        k = scale / math.sqrt(ind)
    else:
        k = scale / math.sqrt(outd)
    kw, kb, kdw, kdb = jax.random.split(key, 4)
    w_base = jax.random.uniform(kw, (ind, outd), jnp.float32, minval=-k, maxval=k)
    b_base = jax.random.uniform(kb, (outd,), jnp.float32, minval=-k, maxval=k)
    # Per-sample plastic (fast-weight) deltas; dw streamed in bf16 to halve the
    # HBM traffic on the dominant (B, ind, outd) term.
    dw = (0.01 * jax.random.normal(kdw, (batch, ind, outd), jnp.float32)).astype(jnp.bfloat16)
    db = 0.01 * jax.random.normal(kdb, (batch, outd), jnp.float32)
    return w_base, b_base, dw, db


if __name__ == "__main__":
    key = jax.random.PRNGKey(0)
    k_in, k_par = jax.random.split(key)

    # Small, deliberately non-lane/sublane-aligned shapes so the host-side
    # padding paths (ind->32, outd->128) are exercised.
    B, IND, OUTD = 16, 24, 40
    x = jax.random.normal(k_in, (B, IND), jnp.float32)
    w_base, b_base, dw, db = init_hebb_linear_params(k_par, IND, OUTD, B,
                                                     scale=1.0, fan_in=False)

    out = hebb_linear(x, w_base, dw, b_base, db, activation="none")
    out = jax.block_until_ready(out)

    # Pure-JAX reference (== torch.baddbmm with per-sample plastic weights,
    # HebbLinear activation 'none').
    w_eff = w_base[None, :, :] + dw.astype(jnp.float32)            # (B, ind, outd)
    ref = jnp.sum(x[:, :, None] * w_eff, axis=1) + b_base[None, :] + db

    assert out.shape == (B, OUTD)
    err = float(jnp.max(jnp.abs(out - ref)))
    # The shared-weight matmul runs as a single bf16 MXU pass with f32
    # accumulation, so allow bf16-level error on that term.
    assert err < 2e-2, err

    print("KERNEL_OK")
</pallas_src>

<mosaic_0001>
module attributes {stable_mosaic.version = 11 : i64} {
  func.func @_hebb_linear_kernel(%arg0: i32, %arg1: i32, %arg2: memref<8x32xf32, #tpu.memory_space<vmem>>, %arg3: memref<32x128xbf16, #tpu.memory_space<vmem>>, %arg4: memref<8x32x128xbf16, #tpu.memory_space<vmem>>, %arg5: memref<8x128xf32, #tpu.memory_space<vmem>>, %arg6: memref<8x128xf32, #tpu.memory_space<vmem>>, %arg7: memref<8x128xf32, #tpu.memory_space<vmem>>) attributes {dimension_semantics = [#tpu.dimension_semantics<parallel>, #tpu.dimension_semantics<arbitrary>], iteration_bounds = array<i64: 2, 1>, scalar_prefetch = 0 : i64, scratch_operands = 1 : i64, tpu.core_type = #tpu.core_type<tc>, window_params = [{transform_indices = @transform_0, window_bounds = array<i64: 8, 32>}, {transform_indices = @transform_1, window_bounds = array<i64: 32, 128>}, {transform_indices = @transform_2, window_bounds = array<i64: 8, 32, 128>}, {transform_indices = @transform_3, window_bounds = array<i64: 8, 128>}, {transform_indices = @transform_4, window_bounds = array<i64: 8, 128>}]} {
    %c0_i32 = arith.constant 0 : i32
    %0 = arith.cmpi eq, %arg1, %c0_i32 : i32
    %1 = arith.extui %0 : i1 to i32
    %c0_i32_0 = arith.constant 0 : i32
    %2 = arith.cmpi ne, %1, %c0_i32_0 : i32
    scf.if %2 {
      %cst_14 = arith.constant 0.000000e+00 : f32
      %20 = vector.broadcast %cst_14 : f32 to vector<8x128xf32>
      %c0_15 = arith.constant 0 : index
      %c0_16 = arith.constant 0 : index
      %21 = vector.load %arg7[%c0_15, %c0_16] : memref<8x128xf32, #tpu.memory_space<vmem>>, vector<8x128xf32>
      tpu.vector_store %arg7[%c0_15, %c0_16], %20 {strides = array<i32>} : memref<8x128xf32, #tpu.memory_space<vmem>>, vector<8x128xf32>,
    } else {
    }
    %c0 = arith.constant 0 : index
    %c0_1 = arith.constant 0 : index
    %3 = vector.load %arg2[%c0, %c0_1] : memref<8x32xf32, #tpu.memory_space<vmem>>, vector<8x32xf32>
    %4 = arith.truncf %3 : vector<8x32xf32> to vector<8x32xbf16>
    %c0_2 = arith.constant 0 : index
    %c0_3 = arith.constant 0 : index
    %5 = vector.load %arg3[%c0_2, %c0_3] : memref<32x128xbf16, #tpu.memory_space<vmem>>, vector<32x128xbf16>
    %cst = arith.constant dense<0.000000e+00> : vector<8x128xf32>
    %6 = tpu.matmul %4, %5, %cst {dimension_numbers = #tpu.dot_dimension_numbers<[1], [0], [0], [1], [0, 0, 1, 1], [], []>} : vector<8x32xbf16>, vector<32x128xbf16>, vector<8x128xf32> -> vector<8x128xf32>
    %7 = vector.shape_cast %3 : vector<8x32xf32> to vector<8x32x1xf32>
    %c0_4 = arith.constant 0 : index
    %c0_5 = arith.constant 0 : index
    %c0_6 = arith.constant 0 : index
    %8 = vector.load %arg4[%c0_4, %c0_5, %c0_6] : memref<8x32x128xbf16, #tpu.memory_space<vmem>>, vector<8x32x128xbf16>
    %9 = arith.extf %8 : vector<8x32x128xbf16> to vector<8x32x128xf32>
    %10 = vector.broadcast %7 : vector<8x32x1xf32> to vector<8x32x128xf32>
    %11 = arith.mulf %10, %9 : vector<8x32x128xf32>
    %cst_7 = arith.constant dense<0.000000e+00> : vector<8x128xf32>
    %12 = vector.multi_reduction <add>, %11, %cst_7 [1] : vector<8x32x128xf32> to vector<8x128xf32>
    %c0_8 = arith.constant 0 : index
    %c0_9 = arith.constant 0 : index
    %13 = vector.load %arg7[%c0_8, %c0_9] : memref<8x128xf32, #tpu.memory_space<vmem>>, vector<8x128xf32>
    %14 = arith.addf %6, %12 : vector<8x128xf32>
    %15 = arith.addf %13, %14 : vector<8x128xf32>
    %c0_10 = arith.constant 0 : index
    %c0_11 = arith.constant 0 : index
    %16 = vector.load %arg7[%c0_10, %c0_11] : memref<8x128xf32, #tpu.memory_space<vmem>>, vector<8x128xf32>
    tpu.vector_store %arg7[%c0_10, %c0_11], %15 {strides = array<i32>} : memref<8x128xf32, #tpu.memory_space<vmem>>, vector<8x128xf32>,
    %c0_i32_12 = arith.constant 0 : i32
    %17 = arith.cmpi eq, %arg1, %c0_i32_12 : i32
    %18 = arith.extui %17 : i1 to i32
    %c0_i32_13 = arith.constant 0 : i32
    %19 = arith.cmpi ne, %18, %c0_i32_13 : i32
    scf.if %19 {
      %c0_14 = arith.constant 0 : index
      %c0_15 = arith.constant 0 : index
      %20 = vector.load %arg7[%c0_14, %c0_15] : memref<8x128xf32, #tpu.memory_space<vmem>>, vector<8x128xf32>
      %c0_16 = arith.constant 0 : index
      %c0_17 = arith.constant 0 : index
      %21 = vector.load %arg5[%c0_16, %c0_17] : memref<8x128xf32, #tpu.memory_space<vmem>>, vector<8x128xf32>
      %22 = arith.addf %20, %21 : vector<8x128xf32>
      %c0_18 = arith.constant 0 : index
      %c0_19 = arith.constant 0 : index
      %23 = vector.load %arg6[%c0_18, %c0_19] : memref<8x128xf32, #tpu.memory_space<vmem>>, vector<8x128xf32>
      tpu.vector_store %arg6[%c0_18, %c0_19], %22 {strides = array<i32>} : memref<8x128xf32, #tpu.memory_space<vmem>>, vector<8x128xf32>,
    } else {
    }
    return
  }
  func.func @transform_0(%arg0: i32, %arg1: i32) -> (i32, i32) {
    %c0_i32 = arith.constant 0 : i32
    return %arg0, %arg1 : i32, i32
  }
  func.func @transform_1(%arg0: i32, %arg1: i32) -> (i32, i32) {
    %c0_i32 = arith.constant 0 : i32
    %c0_i32_0 = arith.constant 0 : i32
    return %arg1, %c0_i32 : i32, i32
  }
  func.func @transform_2(%arg0: i32, %arg1: i32) -> (i32, i32, i32) {
    %c0_i32 = arith.constant 0 : i32
    %c0_i32_0 = arith.constant 0 : i32
    return %arg0, %arg1, %c0_i32 : i32, i32, i32
  }
  func.func @transform_3(%arg0: i32, %arg1: i32) -> (i32, i32) {
    %c0_i32 = arith.constant 0 : i32
    %c0_i32_0 = arith.constant 0 : i32
    return %arg0, %c0_i32 : i32, i32
  }
  func.func @transform_4(%arg0: i32, %arg1: i32) -> (i32, i32) {
    %c0_i32 = arith.constant 0 : i32
    %c0_i32_0 = arith.constant 0 : i32
    return %arg0, %c0_i32 : i32, i32
  }
}

</mosaic_0001>

<llo_original>
// kernel: tpu_custom_call.1
$region0: #{tpu_custom_call.1}
  #allocation0 [shape = 'u32[]', space=smem, size = 0x4, offset = 0x4, fixed_abs, tag = 'smem constant byte address 0x4 - core index']
  #allocation1 [shape = 'u32[144,128]{1,0:T(1,128)}', space=vmem, size = 0x12000, scoped, tag = 'internal scratch']
  #allocation2 [shape = 'f32[8,128]{1,0:T(8,128)}', space=vmem, size = 0x1000, scoped, tag = 'scratch operand']
  %s0 = inlined_call_operand.hbm [shape: f32[16,32], index: 0, kind: input, shape index: {}]
  %s1 = inlined_call_operand.hbm [shape: bf16[32,128], index: 1, kind: input, shape index: {}]
  %s2 = inlined_call_operand.hbm [shape: bf16[16,32,128], index: 2, kind: input, shape index: {}]
  %s3 = inlined_call_operand.hbm [shape: f32[16,128], index: 3, kind: input, shape index: {}]
  %s4 = inlined_call_operand.hbm [shape: f32[16,128], index: 4, kind: output, shape index: {}]
  %s5 = sld [smem:[#allocation0]]
  $region73: #{tpu_custom_call.1} parent=0
    _
  %s7 = ssub.s32 1, %s5
  %s8 = scalar_select 0, %s7, %s5
  $region1: #{tpu_custom_call.1} parent=0
    #allocation3 [shape = 'u8[8192]{0}', space=vmem, size = 0x2000, scoped, tag = 'input window, operand 0']
    #allocation4 [shape = 's32[2]{0}', space=sflag, size = 0x8, scoped, tag = 'scoped memory for tpu_custom_call.1']
    #allocation5 [shape = 's32[2]{0}', space=sflag, size = 0x8, scoped, tag = 'scoped memory for tpu_custom_call.1']
    #allocation6 [shape = 'u8[8192]{0}', space=vmem, size = 0x2000, scoped, tag = 'input window, operand 1, single buffered']
    #allocation7 [shape = 's32[1]{0}', space=sflag, size = 0x4, scoped, tag = 'scoped memory for tpu_custom_call.1']
    #allocation8 [shape = 'u8[131072]{0}', space=vmem, size = 0x20000, scoped, tag = 'input window, operand 2']
    #allocation9 [shape = 'u8[8192]{0}', space=vmem, size = 0x2000, scoped, tag = 'input window, operand 3']
    #allocation10 [shape = 'u8[8192]{0}', space=vmem, size = 0x2000, scoped, tag = 'output window, operand 0']
    %9 = vsyncpa [#allocation4], 0
    %s10 = scalar_lea.sflag [#allocation4], 1
    %11 = vsyncpa %s10, 0
    %12 = vsyncpa [#allocation7], 0
    %13 = vsyncpa [#allocation5], 0
    %s14 = scalar_lea.sflag [#allocation5], 1
    %15 = vsyncpa %s14, 0
    loop: start=0, step=1, limit=4
    $region2: #{tpu_custom_call.1} parent=1 // loop_pre_header
      _
    $region3: #{tpu_custom_call.1} parent=1 // loop_header
      %s17 = sphi 0, %s21
      %p18 = scmp.ge.s32.totalorder %s17, 4
      %s24 = sphi 0, %s36
      %s25 = sphi 0, %s32
      %s26 = sphi 0, %s24
      %s27 = sphi 0, %s25
      %s28 = sphi 0, %s26
      %s29 = sphi 0, %s27
      %s41 = sphi 0, %s43
      %s44 = sphi 0, %s41
      %s45 = sphi 0, %s44
      %s61 = sphi 0, %s45
      %s67 = sphi 0, %s69
      %s70 = sphi 0, %s67
      %s71 = sphi 0, %s70
      %s87 = sphi 0, %s71
      %s95 = sphi 0, %s97
      %s98 = sphi 0, %s95
      %s99 = sphi 0, %s98
      %s115 = sphi 0, %s99
      %s121 = sphi 0, %s123
      %s124 = sphi 0, %s121
      %s125 = sphi 0, %s124
      %s141 = sphi 0, %s125
      %s147 = sphi 0, %s149
      %s150 = sphi 0, %s147
      %s151 = sphi 0, %s150
      %s167 = sphi 0, %s151
    $region4: #{tpu_custom_call.1} parent=1 // loop_header_branch
      %20 = sbr.rel (%p18) target = $region8
    $region5: #{tpu_custom_call.1} parent=1 // loop_body
      %s22 = ssub.s32 %s17, 1
      %s23 = ssub.s32 %s17, 2
      %s30 = sadd.s32 1, %s25
      %p31 = scmp.ge.s32.totalorder %s30, 1
      %s32 = scalar_select %p31, 0, %s30
      %s33 = sadd.s32 1, %s24
      %s34 = scalar_select %p31, %s33, %s24
      %p35 = scmp.ge.s32.totalorder %s34, 2
      %s36 = scalar_select %p35, 0, %s34
      %s37 = ssub.s32 %s24, %s36
      %s38 = ssub.s32 %s25, %s32
      %s39 = sor.u32 %s37, %s38
      %p40 = scmp.eq.s32.totalorder %s39, 0
      %s42 = sadd.s32 %s41, 1
      %s43 = scalar_select %p40, %s41, %s42
      %p46 = pneg %p40
      %p47 = scmp.eq.s32.totalorder %s17, 1
      %p48 = por %p46, %p47
      %p49 = scmp.ne.s32.totalorder %s41, %s44
      %p50 = scmp.eq.s32.totalorder %s17, 0
      %p51 = por %p49, %p50
      %p52 = scmp.ne.s32.totalorder %s41, %s44
      %p53 = scmp.eq.s32.totalorder %s22, 1
      %p54 = por %p52, %p53
      %p55 = scmp.ne.s32.totalorder %s44, %s45
      %p56 = scmp.eq.s32.totalorder %s22, 0
      %p57 = por %p55, %p56
      %p58 = scmp.ne.s32.totalorder %s44, %s45
      %p59 = scmp.eq.s32.totalorder %s23, 1
      %p60 = por %p58, %p59
      %p62 = scmp.ne.s32.totalorder %s45, %s61
      %p63 = scmp.eq.s32.totalorder %s23, 0
      %p64 = por %p62, %p63
      %s65 = ssub.s32 %s25, %s32
      %p66 = scmp.eq.s32.totalorder %s65, 0
      %s68 = sadd.s32 %s67, 1
      %s69 = scalar_select %p66, %s67, %s68
      %p72 = pneg %p66
      %p73 = scmp.eq.s32.totalorder %s17, 1
      %p74 = por %p72, %p73
      %p75 = scmp.ne.s32.totalorder %s67, %s70
      %p76 = scmp.eq.s32.totalorder %s17, 0
      %p77 = por %p75, %p76
      %p78 = scmp.ne.s32.totalorder %s67, %s70
      %p79 = scmp.eq.s32.totalorder %s22, 1
      %p80 = por %p78, %p79
      %p81 = scmp.ne.s32.totalorder %s70, %s71
      %p82 = scmp.eq.s32.totalorder %s22, 0
      %p83 = por %p81, %p82
      %p84 = scmp.ne.s32.totalorder %s70, %s71
      %p85 = scmp.eq.s32.totalorder %s23, 1
      %p86 = por %p84, %p85
      %p88 = scmp.ne.s32.totalorder %s71, %s87
      %p89 = scmp.eq.s32.totalorder %s23, 0
      %p90 = por %p88, %p89
      %s91 = ssub.s32 %s24, %s36
      %s92 = ssub.s32 %s25, %s32
      %s93 = sor.u32 %s91, %s92
      %p94 = scmp.eq.s32.totalorder %s93, 0
      %s96 = sadd.s32 %s95, 1
      %s97 = scalar_select %p94, %s95, %s96
      %p100 = pneg %p94
      %p101 = scmp.eq.s32.totalorder %s17, 1
      %p102 = por %p100, %p101
      %p103 = scmp.ne.s32.totalorder %s95, %s98
      %p104 = scmp.eq.s32.totalorder %s17, 0
      %p105 = por %p103, %p104
      %p106 = scmp.ne.s32.totalorder %s95, %s98
      %p107 = scmp.eq.s32.totalorder %s22, 1
      %p108 = por %p106, %p107
      %p109 = scmp.ne.s32.totalorder %s98, %s99
      %p110 = scmp.eq.s32.totalorder %s22, 0
      %p111 = por %p109, %p110
      %p112 = scmp.ne.s32.totalorder %s98, %s99
      %p113 = scmp.eq.s32.totalorder %s23, 1
      %p114 = por %p112, %p113
      %p116 = scmp.ne.s32.totalorder %s99, %s115
      %p117 = scmp.eq.s32.totalorder %s23, 0
      %p118 = por %p116, %p117
      %s119 = ssub.s32 %s24, %s36
      %p120 = scmp.eq.s32.totalorder %s119, 0
      %s122 = sadd.s32 %s121, 1
      %s123 = scalar_select %p120, %s121, %s122
      %p126 = pneg %p120
      %p127 = scmp.eq.s32.totalorder %s17, 1
      %p128 = por %p126, %p127
      %p129 = scmp.ne.s32.totalorder %s121, %s124
      %p130 = scmp.eq.s32.totalorder %s17, 0
      %p131 = por %p129, %p130
      %p132 = scmp.ne.s32.totalorder %s121, %s124
      %p133 = scmp.eq.s32.totalorder %s22, 1
      %p134 = por %p132, %p133
      %p135 = scmp.ne.s32.totalorder %s124, %s125
      %p136 = scmp.eq.s32.totalorder %s22, 0
      %p137 = por %p135, %p136
      %p138 = scmp.ne.s32.totalorder %s124, %s125
      %p139 = scmp.eq.s32.totalorder %s23, 1
      %p140 = por %p138, %p139
      %p142 = scmp.ne.s32.totalorder %s125, %s141
      %p143 = scmp.eq.s32.totalorder %s23, 0
      %p144 = por %p142, %p143
      %s145 = ssub.s32 %s24, %s36
      %p146 = scmp.eq.s32.totalorder %s145, 0
      %s148 = sadd.s32 %s147, 1
      %s149 = scalar_select %p146, %s147, %s148
      %p152 = pneg %p146
      %p153 = scmp.eq.s32.totalorder %s17, 1
      %p154 = por %p152, %p153
      %p155 = scmp.ne.s32.totalorder %s147, %s150
      %p156 = scmp.eq.s32.totalorder %s17, 0
      %p157 = por %p155, %p156
      %p158 = scmp.ne.s32.totalorder %s147, %s150
      %p159 = scmp.eq.s32.totalorder %s22, 1
      %p160 = por %p158, %p159
      %p161 = scmp.ne.s32.totalorder %s150, %s151
      %p162 = scmp.eq.s32.totalorder %s22, 0
      %p163 = por %p161, %p162
      %p164 = scmp.ne.s32.totalorder %s150, %s151
      %p165 = scmp.eq.s32.totalorder %s23, 1
      %p166 = por %p164, %p165
      %p168 = scmp.ne.s32.totalorder %s151, %s167
      %p169 = scmp.eq.s32.totalorder %s23, 0
      %p170 = por %p168, %p169
      %p171 = scmp.le.s32.totalorder 1, %s17
      %p172 = scmp.lt.s32.totalorder %s17, 3
      %p173 = pnand %p171, %p172
      %p174 = pneg %p173
      // Predicated region
      $region9: #{tpu_custom_call.1} parent=5 // pred_check
        _
      $region10: #{tpu_custom_call.1} parent=5 // pred_check_branch
        %176 = sbr.rel (%p173) target = $region12
      $region11: #{tpu_custom_call.1} parent=5 // pred_region
        %s177 = ssub.s32 %s17, 1
        // Predicated region
        $region13: #{tpu_custom_call.1} parent=11 // pred_check
          %p178 = pneg %p83
        $region14: #{tpu_custom_call.1} parent=11 // pred_check_branch
          %180 = sbr.rel (%p178) target = $region16
        $region15: #{tpu_custom_call.1} parent=11 // pred_region
          %s181 = smul.u32 4, %s27
          %s183 = ssub.s32 256, 256
          %184 = vsyncadd [#allocation7], %s183
          %s185 = smul.addr %s181, 64
          %s186 = scalar_lea.hbm %s1, %s185
          %s187 = sshll.u32 [#allocation6], 4
          %s188 = int_to_ptr.vmem [resolvable:$true] %s187
          %193 = dma.hbm_to_vmem [thread:$0]  %s186, 256, %s188, [#allocation7], 64, 64, 4
        $region16: #{tpu_custom_call.1} parent=11 // pred_fallthru
          _
      $region12: #{tpu_custom_call.1} parent=5 // pred_fallthru
        _
      %p194 = scmp.lt.s32.totalorder %s17, 2
      // Predicated region
      $region17: #{tpu_custom_call.1} parent=5 // pred_check
        %p195 = pneg %p194
      $region18: #{tpu_custom_call.1} parent=5 // pred_check_branch
        %197 = sbr.rel (%p195) target = $region20
      $region19: #{tpu_custom_call.1} parent=5 // pred_region
        // Predicated region
        $region21: #{tpu_custom_call.1} parent=19 // pred_check
          %p198 = pneg %p51
        $region22: #{tpu_custom_call.1} parent=19 // pred_check_branch
          %200 = sbr.rel (%p198) target = $region24
        $region23: #{tpu_custom_call.1} parent=19 // pred_region
          %s201 = sand.u32 %s17, 1
          %s202 = scalar_lea.sflag [#allocation4], %s201
          %s203 = sand.u32 %s41, 1
          %s204 = smul.addr %s203, 8
          %s205 = scalar_lea.vmem [#allocation3], %s204
          %s207 = ssub.s32 128, 128
          %208 = vsyncadd %s202, %s207
          %s209 = sadd.s32 %s25, %s24
          %s210 = smul.addr %s209, 128
          %s211 = scalar_lea.hbm %s0, %s210
          %s213 = sshll.u32 %s205, 4
          %s214 = int_to_ptr.vmem [resolvable:$true] %s213
          %216 = dma.hbm_to_vmem [thread:$0]  %s211, 128, %s214, %s202
        $region24: #{tpu_custom_call.1} parent=19 // pred_fallthru
          _
        // Predicated region
        $region25: #{tpu_custom_call.1} parent=19 // pred_check
          %p217 = pneg %p105
        $region26: #{tpu_custom_call.1} parent=19 // pred_check_branch
          %219 = sbr.rel (%p217) target = $region28
        $region27: #{tpu_custom_call.1} parent=19 // pred_region
          %s220 = sand.u32 %s17, 1
          %s221 = scalar_lea.sflag [#allocation4], %s220
          %s222 = sand.u32 %s95, 1
          %s223 = smul.addr %s222, 128
          %s224 = scalar_lea.vmem [#allocation8], %s223
          %s225 = smul.u32 8, %s24
          %s226 = smul.u32 4, %s25
          %s228 = ssub.s32 2048, 2048
          %229 = vsyncadd %s221, %s228
          %s230 = smul.addr %s225, 4
          %s231 = sadd.s32 %s226, %s230
          %s232 = smul.addr %s231, 64
          %s233 = scalar_lea.hbm %s2, %s232
          %s234 = sshll.u32 %s224, 4
          %s235 = int_to_ptr.vmem [resolvable:$true] %s234
          %240 = dma.hbm_to_vmem [thread:$0]  %s233, 2048, %s235, %s221, 64, 64, 4
        $region28: #{tpu_custom_call.1} parent=19 // pred_fallthru
          _
        // Predicated region
        $region29: #{tpu_custom_call.1} parent=19 // pred_check
          %p241 = pneg %p131
        $region30: #{tpu_custom_call.1} parent=19 // pred_check_branch
          %243 = sbr.rel (%p241) target = $region32
        $region31: #{tpu_custom_call.1} parent=19 // pred_region
          %s244 = sand.u32 %s17, 1
          %s245 = scalar_lea.sflag [#allocation4], %s244
          %s246 = sand.u32 %s121, 1
          %s247 = smul.addr %s246, 8
          %s248 = scalar_lea.vmem [#allocation9], %s247
          %s250 = ssub.s32 128, 128
          %251 = vsyncadd %s245, %s250
          %s252 = smul.addr %s24, 128
          %s253 = scalar_lea.hbm %s3, %s252
          %s255 = sshll.u32 %s248, 4
          %s256 = int_to_ptr.vmem [resolvable:$true] %s255
          %258 = dma.hbm_to_vmem [thread:$0]  %s253, 128, %s256, %s245
        $region32: #{tpu_custom_call.1} parent=19 // pred_fallthru
          _
      $region20: #{tpu_custom_call.1} parent=5 // pred_fallthru
        _
      %p259 = scmp.le.s32.totalorder 1, %s17
      %p260 = scmp.lt.s32.totalorder %s17, 3
      %p261 = pnand %p259, %p260
      %p262 = pneg %p261
      // Predicated region
      $region33: #{tpu_custom_call.1} parent=5 // pred_check
        _
      $region34: #{tpu_custom_call.1} parent=5 // pred_check_branch
        %264 = sbr.rel (%p261) target = $region36
      $region35: #{tpu_custom_call.1} parent=5 // pred_region
        %s265 = ssub.s32 %s17, 1
        %s266 = sand.u32 %s22, 1
        %s267 = scalar_lea.sflag [#allocation4], %s266
        %s268 = sand.u32 %s44, 1
        %s269 = smul.addr %s268, 8
        %s270 = scalar_lea.vmem [#allocation3], %s269
        // Predicated region
        $region37: #{tpu_custom_call.1} parent=35 // pred_check
          %p271 = pneg %p57
        $region38: #{tpu_custom_call.1} parent=35 // pred_check_branch
          %273 = sbr.rel (%p271) target = $region40
        $region39: #{tpu_custom_call.1} parent=35 // pred_region
          %274 = dma.done %s267, 128
        $region40: #{tpu_custom_call.1} parent=35 // pred_fallthru
          _
        // Predicated region
        $region41: #{tpu_custom_call.1} parent=35 // pred_check
          %p275 = pneg %p83
        $region42: #{tpu_custom_call.1} parent=35 // pred_check_branch
          %277 = sbr.rel (%p275) target = $region44
        $region43: #{tpu_custom_call.1} parent=35 // pred_region
          %278 = dma.done [#allocation7], 256
        $region44: #{tpu_custom_call.1} parent=35 // pred_fallthru
          _
        %s279 = sand.u32 %s22, 1
        %s280 = scalar_lea.sflag [#allocation4], %s279
        %s281 = sand.u32 %s98, 1
        %s282 = smul.addr %s281, 128
        %s283 = scalar_lea.vmem [#allocation8], %s282
        // Predicated region
        $region45: #{tpu_custom_call.1} parent=35 // pred_check
          %p284 = pneg %p111
        $region46: #{tpu_custom_call.1} parent=35 // pred_check_branch
          %286 = sbr.rel (%p284) target = $region48
        $region47: #{tpu_custom_call.1} parent=35 // pred_region
          %287 = dma.done %s280, 2048
        $region48: #{tpu_custom_call.1} parent=35 // pred_fallthru
          _
        %s288 = sand.u32 %s22, 1
        %s289 = scalar_lea.sflag [#allocation4], %s288
        %s290 = sand.u32 %s124, 1
        %s291 = smul.addr %s290, 8
        %s292 = scalar_lea.vmem [#allocation9], %s291
        // Predicated region
        $region49: #{tpu_custom_call.1} parent=35 // pred_check
          %p293 = pneg %p137
        $region50: #{tpu_custom_call.1} parent=35 // pred_check_branch
          %295 = sbr.rel (%p293) target = $region52
        $region51: #{tpu_custom_call.1} parent=35 // pred_region
          %296 = dma.done %s289, 128
        $region52: #{tpu_custom_call.1} parent=35 // pred_fallthru
          _
        %s297 = sand.u32 %s22, 1
        %s298 = scalar_lea.sflag [#allocation4], %s297
        %s299 = sand.u32 %s44, 1
        %s300 = smul.addr %s299, 8
        %s301 = scalar_lea.vmem [#allocation3], %s300
        %p302 = pneg %p57
        %p303 = pneg %p54
        %p304 = pneg %p83
        %p305 = pneg %p80
        %s306 = sand.u32 %s22, 1
        %s307 = scalar_lea.sflag [#allocation4], %s306
        %s308 = sand.u32 %s98, 1
        %s309 = smul.addr %s308, 128
        %s310 = scalar_lea.vmem [#allocation8], %s309
        %p311 = pneg %p111
        %p312 = pneg %p108
        %s313 = sand.u32 %s22, 1
        %s314 = scalar_lea.sflag [#allocation4], %s313
        %s315 = sand.u32 %s124, 1
        %s316 = smul.addr %s315, 8
        %s317 = scalar_lea.vmem [#allocation9], %s316
        %p318 = pneg %p137
        %p319 = pneg %p134
        %p320 = pneg %p163
        %p321 = pneg %p160
        %s322 = sand.u32 %s150, 1
        %s323 = scalar_lea.sflag [#allocation5], %s322
        %s324 = sand.u32 %s150, 1
        %s325 = smul.addr %s324, 8
        %s326 = scalar_lea.vmem [#allocation10], %s325
        %s327 = smul.u32 4, %s27
        %s328 = smul.u32 8, %s26
        %s329 = smul.u32 4, %s27
        %p331 = scmp.eq.s32.totalorder %s27, 0
        // Predicated region
        $region53: #{tpu_custom_call.1} parent=35 // pred_check
          %p332 = pneg %p331
        $region54: #{tpu_custom_call.1} parent=35 // pred_check_branch
          %334 = sbr.rel (%p332) target = $region56
        $region55: #{tpu_custom_call.1} parent=35 // pred_region
          %335 = vst [vmem:[#allocation2] sm:$0xff] 0.0
        $region56: #{tpu_custom_call.1} parent=35 // pred_fallthru
          _
        %v336 = vld [vmem:[%s270] sm:$0xff]
        %v337 = vpack.c.bf16 %v336, %v336
        %v338 = vld [vmem:[#allocation6] sm:$0xf]
        %v339 = vld [vmem:[#allocation6 + $0x4] sm:$0xf]
        %v340 = vld [vmem:[#allocation6 + $0x8] sm:$0xf]
        %v341 = vld [vmem:[#allocation6 + $0xc] sm:$0xf]
        %v342 = vlaneseq
        %v343 = vshrl.u32 %v342, 7
        %v344 = vsub.s32 0, %v343
        %v345 = vrot.slane %v336, %v344
        %347 = vbcast.lane.b32.xlu0 %v345, 256
        %v348 = vpop.permute.xlu0 %347
        %s350 = sor.u32 256, 8
        %351 = vbcast.lane.b32.xlu0 %v345, %s350
        %v352 = vpop.permute.xlu0 %351
        %s354 = sor.u32 256, 16
        %355 = vbcast.lane.b32.xlu0 %v345, %s354
        %v356 = vpop.permute.xlu0 %355
        %s358 = sor.u32 256, 24
        %359 = vbcast.lane.b32.xlu0 %v345, %s358
        %v360 = vpop.permute.xlu0 %359
        %v361 = vlaneseq
        %v362 = vshrl.u32 %v361, 7
        %v363 = vsub.s32 1, %v362
        %v364 = vrot.slane %v336, %v363
        %366 = vbcast.lane.b32.xlu0 %v364, 256
        %v367 = vpop.permute.xlu0 %366
        %s369 = sor.u32 256, 8
        %370 = vbcast.lane.b32.xlu0 %v364, %s369
        %v371 = vpop.permute.xlu0 %370
        %s373 = sor.u32 256, 16
        %374 = vbcast.lane.b32.xlu0 %v364, %s373
        %v375 = vpop.permute.xlu0 %374
        %s377 = sor.u32 256, 24
        %378 = vbcast.lane.b32.xlu0 %v364, %s377
        %v379 = vpop.permute.xlu0 %378
        %v380 = vlaneseq
        %v381 = vshrl.u32 %v380, 7
        %v382 = vsub.s32 2, %v381
        %v383 = vrot.slane %v336, %v382
        %385 = vbcast.lane.b32.xlu0 %v383, 256
        %v386 = vpop.permute.xlu0 %385
        %s388 = sor.u32 256, 8
        %389 = vbcast.lane.b32.xlu0 %v383, %s388
        %v390 = vpop.permute.xlu0 %389
        %s392 = sor.u32 256, 16
        %393 = vbcast.lane.b32.xlu0 %v383, %s392
        %v394 = vpop.permute.xlu0 %393
        %s396 = sor.u32 256, 24
        %397 = vbcast.lane.b32.xlu0 %v383, %s396
        %v398 = vpop.permute.xlu0 %397
        %v399 = vlaneseq
        %v400 = vshrl.u32 %v399, 7
        %v401 = vsub.s32 3, %v400
        %v402 = vrot.slane %v336, %v401
        %404 = vbcast.lane.b32.xlu0 %v402, 256
        %v405 = vpop.permute.xlu0 %404
        %s407 = sor.u32 256, 8
        %408 = vbcast.lane.b32.xlu0 %v402, %s407
        %v409 = vpop.permute.xlu0 %408
        %s411 = sor.u32 256, 16
        %412 = vbcast.lane.b32.xlu0 %v402, %s411
        %v413 = vpop.permute.xlu0 %412
        %s415 = sor.u32 256, 24
        %416 = vbcast.lane.b32.xlu0 %v402, %s415
        %v417 = vpop.permute.xlu0 %416
        %v418 = vlaneseq
        %v419 = vshrl.u32 %v418, 7
        %v420 = vsub.s32 4, %v419
        %v421 = vrot.slane %v336, %v420
        %423 = vbcast.lane.b32.xlu0 %v421, 256
        %v424 = vpop.permute.xlu0 %423
        %s426 = sor.u32 256, 8
        %427 = vbcast.lane.b32.xlu0 %v421, %s426
        %v428 = vpop.permute.xlu0 %427
        %s430 = sor.u32 256, 16
        %431 = vbcast.lane.b32.xlu0 %v421, %s430
        %v432 = vpop.permute.xlu0 %431
        %s434 = sor.u32 256, 24
        %435 = vbcast.lane.b32.xlu0 %v421, %s434
        %v436 = vpop.permute.xlu0 %435
        %v437 = vlaneseq
        %v438 = vshrl.u32 %v437, 7
        %v439 = vsub.s32 5, %v438
        %v440 = vrot.slane %v336, %v439
        %442 = vbcast.lane.b32.xlu0 %v440, 256
        %v443 = vpop.permute.xlu0 %442
        %s445 = sor.u32 256, 8
        %446 = vbcast.lane.b32.xlu0 %v440, %s445
        %v447 = vpop.permute.xlu0 %446
        %s449 = sor.u32 256, 16
        %450 = vbcast.lane.b32.xlu0 %v440, %s449
        %v451 = vpop.permute.xlu0 %450
        %s453 = sor.u32 256, 24
        %454 = vbcast.lane.b32.xlu0 %v440, %s453
        %v455 = vpop.permute.xlu0 %454
        %v456 = vlaneseq
        %v457 = vshrl.u32 %v456, 7
        %v458 = vsub.s32 6, %v457
        %v459 = vrot.slane %v336, %v458
        %461 = vbcast.lane.b32.xlu0 %v459, 256
        %v462 = vpop.permute.xlu0 %461
        %s464 = sor.u32 256, 8
        %465 = vbcast.lane.b32.xlu0 %v459, %s464
        %v466 = vpop.permute.xlu0 %465
        %s468 = sor.u32 256, 16
        %469 = vbcast.lane.b32.xlu0 %v459, %s468
        %v470 = vpop.permute.xlu0 %469
        %s472 = sor.u32 256, 24
        %473 = vbcast.lane.b32.xlu0 %v459, %s472
        %v474 = vpop.permute.xlu0 %473
        %v475 = vlaneseq
        %v476 = vshrl.u32 %v475, 7
        %v477 = vsub.s32 7, %v476
        %v478 = vrot.slane %v336, %v477
        %480 = vbcast.lane.b32.xlu0 %v478, 256
        %v481 = vpop.permute.xlu0 %480
        %s483 = sor.u32 256, 8
        %484 = vbcast.lane.b32.xlu0 %v478, %s483
        %v485 = vpop.permute.xlu0 %484
        %s487 = sor.u32 256, 16
        %488 = vbcast.lane.b32.xlu0 %v478, %s487
        %v489 = vpop.permute.xlu0 %488
        %s491 = sor.u32 256, 24
        %492 = vbcast.lane.b32.xlu0 %v478, %s491
        %v493 = vpop.permute.xlu0 %492
        %v494 = vld [vmem:[%s283] sm:$0xf]
        %v495 = vld [vmem:[%s283 + $0x4] sm:$0xf]
        %v496 = vld [vmem:[%s283 + $0x8] sm:$0xf]
        %v497 = vld [vmem:[%s283 + $0xc] sm:$0xf]
        %v498 = vld [vmem:[%s283 + $0x10] sm:$0xf]
        %v499 = vld [vmem:[%s283 + $0x14] sm:$0xf]
        %v500 = vld [vmem:[%s283 + $0x18] sm:$0xf]
        %v501 = vld [vmem:[%s283 + $0x1c] sm:$0xf]
        %v502 = vld [vmem:[%s283 + $0x20] sm:$0xf]
        %v503 = vld [vmem:[%s283 + $0x24] sm:$0xf]
        %v504 = vld [vmem:[%s283 + $0x28] sm:$0xf]
        %v505 = vld [vmem:[%s283 + $0x2c] sm:$0xf]
        %v506 = vld [vmem:[%s283 + $0x30] sm:$0xf]
        %v507 = vld [vmem:[%s283 + $0x34] sm:$0xf]
        %v508 = vld [vmem:[%s283 + $0x38] sm:$0xf]
        %v509 = vld [vmem:[%s283 + $0x3c] sm:$0xf]
        %v510 = vld [vmem:[%s283 + $0x40] sm:$0xf]
        %v511 = vld [vmem:[%s283 + $0x44] sm:$0xf]
        %v512 = vld [vmem:[%s283 + $0x48] sm:$0xf]
        %v513 = vld [vmem:[%s283 + $0x4c] sm:$0xf]
        %v514 = vld [vmem:[%s283 + $0x50] sm:$0xf]
        %v515 = vld [vmem:[%s283 + $0x54] sm:$0xf]
        %v516 = vld [vmem:[%s283 + $0x58] sm:$0xf]
        %v517 = vld [vmem:[%s283 + $0x5c] sm:$0xf]
        %v518 = vld [vmem:[%s283 + $0x60] sm:$0xf]
        %v519 = vld [vmem:[%s283 + $0x64] sm:$0xf]
        %v520 = vld [vmem:[%s283 + $0x68] sm:$0xf]
        %v521 = vld [vmem:[%s283 + $0x6c] sm:$0xf]
        %v522 = vld [vmem:[%s283 + $0x70] sm:$0xf]
        %v523 = vld [vmem:[%s283 + $0x74] sm:$0xf]
        %v524 = vld [vmem:[%s283 + $0x78] sm:$0xf]
        %v525 = vld [vmem:[%s283 + $0x7c] sm:$0xf]
        %v526 = vunpack.c.l.bf16 %v494
        %v527 = vunpack.c.l.bf16 %v495
        %v528 = vunpack.c.l.bf16 %v496
        %v529 = vunpack.c.l.bf16 %v497
        %v530 = vunpack.c.l.bf16 %v498
        %v531 = vunpack.c.l.bf16 %v499
        %v532 = vunpack.c.l.bf16 %v500
        %v533 = vunpack.c.l.bf16 %v501
        %v534 = vunpack.c.l.bf16 %v502
        %v535 = vunpack.c.l.bf16 %v503
        %v536 = vunpack.c.l.bf16 %v504
        %v537 = vunpack.c.l.bf16 %v505
        %v538 = vunpack.c.l.bf16 %v506
        %v539 = vunpack.c.l.bf16 %v507
        %v540 = vunpack.c.l.bf16 %v508
        %v541 = vunpack.c.l.bf16 %v509
        %v542 = vunpack.c.l.bf16 %v510
        %v543 = vunpack.c.l.bf16 %v511
        %v544 = vunpack.c.l.bf16 %v512
        %v545 = vunpack.c.l.bf16 %v513
        %v546 = vunpack.c.l.bf16 %v514
        %v547 = vunpack.c.l.bf16 %v515
        %v548 = vunpack.c.l.bf16 %v516
        %v549 = vunpack.c.l.bf16 %v517
        %v550 = vunpack.c.l.bf16 %v518
        %v551 = vunpack.c.l.bf16 %v519
        %v552 = vunpack.c.l.bf16 %v520
        %v553 = vunpack.c.l.bf16 %v521
        %v554 = vunpack.c.l.bf16 %v522
        %v555 = vunpack.c.l.bf16 %v523
        %v556 = vunpack.c.l.bf16 %v524
        %v557 = vunpack.c.l.bf16 %v525
        %v558 = vmul.f32 %v348, %v526
        %v559 = vmul.f32 %v352, %v527
        %v560 = vmul.f32 %v356, %v528
        %v561 = vmul.f32 %v360, %v529
        %v562 = vmul.f32 %v367, %v530
        %v563 = vmul.f32 %v371, %v531
        %v564 = vmul.f32 %v375, %v532
        %v565 = vmul.f32 %v379, %v533
        %v566 = vmul.f32 %v386, %v534
        %v567 = vmul.f32 %v390, %v535
        %v568 = vmul.f32 %v394, %v536
        %v569 = vmul.f32 %v398, %v537
        %v570 = vmul.f32 %v405, %v538
        %v571 = vmul.f32 %v409, %v539
        %v572 = vmul.f32 %v413, %v540
        %v573 = vmul.f32 %v417, %v541
        %v574 = vmul.f32 %v424, %v542
        %v575 = vmul.f32 %v428, %v543
        %v576 = vmul.f32 %v432, %v544
        %v577 = vmul.f32 %v436, %v545
        %v578 = vmul.f32 %v443, %v546
        %v579 = vmul.f32 %v447, %v547
        %v580 = vmul.f32 %v451, %v548
        %v581 = vmul.f32 %v455, %v549
        %v582 = vmul.f32 %v462, %v550
        %v583 = vmul.f32 %v466, %v551
        %v584 = vmul.f32 %v470, %v552
        %v585 = vmul.f32 %v474, %v553
        %v586 = vmul.f32 %v481, %v554
        %v587 = vmul.f32 %v485, %v555
        %v588 = vmul.f32 %v489, %v556
        %v589 = vmul.f32 %v493, %v557
        %v590 = vadd.f32 %v558, %v559
        %v591 = vadd.f32 %v590, %v560
        %v592 = vadd.f32 %v591, %v561
        %v593 = vrot.slane %v592, 4
        %v594 = vadd.f32 %v592, %v593
        %v595 = vrot.slane %v594, 2
        %v596 = vadd.f32 %v594, %v595
        %v597 = vrot.slane %v596, 1
        %v598 = vadd.f32 %v596, %v597
        %v599 = vadd.f32 %v562, %v563
        %v600 = vadd.f32 %v599, %v564
        %v601 = vadd.f32 %v600, %v565
        %v602 = vrot.slane %v601, 4
        %v603 = vadd.f32 %v601, %v602
        %v604 = vrot.slane %v603, 2
        %v605 = vadd.f32 %v603, %v604
        %v606 = vrot.slane %v605, 1
        %v607 = vadd.f32 %v605, %v606
        %v608 = vadd.f32 %v566, %v567
        %v609 = vadd.f32 %v608, %v568
        %v610 = vadd.f32 %v609, %v569
        %v611 = vrot.slane %v610, 4
        %v612 = vadd.f32 %v610, %v611
        %v613 = vrot.slane %v612, 2
        %v614 = vadd.f32 %v612, %v613
        %v615 = vrot.slane %v614, 1
        %v616 = vadd.f32 %v614, %v615
        %v617 = vadd.f32 %v570, %v571
        %v618 = vadd.f32 %v617, %v572
        %v619 = vadd.f32 %v618, %v573
        %v620 = vrot.slane %v619, 4
        %v621 = vadd.f32 %v619, %v620
        %v622 = vrot.slane %v621, 2
        %v623 = vadd.f32 %v621, %v622
        %v624 = vrot.slane %v623, 1
        %v625 = vadd.f32 %v623, %v624
        %v626 = vadd.f32 %v574, %v575
        %v627 = vadd.f32 %v626, %v576
        %v628 = vadd.f32 %v627, %v577
        %v629 = vrot.slane %v628, 4
        %v630 = vadd.f32 %v628, %v629
        %v631 = vrot.slane %v630, 2
        %v632 = vadd.f32 %v630, %v631
        %v633 = vrot.slane %v632, 1
        %v634 = vadd.f32 %v632, %v633
        %v635 = vadd.f32 %v578, %v579
        %v636 = vadd.f32 %v635, %v580
        %v637 = vadd.f32 %v636, %v581
        %v638 = vrot.slane %v637, 4
        %v639 = vadd.f32 %v637, %v638
        %v640 = vrot.slane %v639, 2
        %v641 = vadd.f32 %v639, %v640
        %v642 = vrot.slane %v641, 1
        %v643 = vadd.f32 %v641, %v642
        %v644 = vadd.f32 %v582, %v583
        %v645 = vadd.f32 %v644, %v584
        %v646 = vadd.f32 %v645, %v585
        %v647 = vrot.slane %v646, 4
        %v648 = vadd.f32 %v646, %v647
        %v649 = vrot.slane %v648, 2
        %v650 = vadd.f32 %v648, %v649
        %v651 = vrot.slane %v650, 1
        %v652 = vadd.f32 %v650, %v651
        %v653 = vadd.f32 %v586, %v587
        %v654 = vadd.f32 %v653, %v588
        %v655 = vadd.f32 %v654, %v589
        %v656 = vrot.slane %v655, 4
        %v657 = vadd.f32 %v655, %v656
        %v658 = vrot.slane %v657, 2
        %v659 = vadd.f32 %v657, %v658
        %v660 = vrot.slane %v659, 1
        %v661 = vadd.f32 %v659, %v660
        %v662 = vld [vmem:[#allocation2] sm:$0xff]
        %v667 = vunpack.c.l.b16 %v338
        %v668 = vunpack.c.l.b16 %v339
        %v669 = vunpack.c.l.b16 %v340
        %v670 = vunpack.c.l.b16 %v341
        %v671 = vpack.c.b16 %v668, %v667
        %v672 = vpack.c.b16 %v670, %v669
        %vm683 = vcmask 1041409
        %v684 = vsel %vm683, %v607, %v598
        %vm685 = vcmask 1042434
        %v686 = vsel %vm685, %v616, %v684
        %vm687 = vcmask 1043459
        %v688 = vsel %vm687, %v625, %v686
        %vm689 = vcmask 1044484
        %v690 = vsel %vm689, %v634, %v688
        %vm691 = vcmask 1045509
        %v692 = vsel %vm691, %v643, %v690
        %vm693 = vcmask 1046534
        %v694 = vsel %vm693, %v652, %v692
        %vm695 = vcmask 1047559
        %v696 = vsel %vm695, %v661, %v694
        %vm698 = vcmask 261120
        %v700 = vsel %vm698, %v337, 0
        %702 = vmatprep.subr.bf16.mxu0 0
        %703 = vmatpush1.bf16.msra.mxu0 0
        %704 = vmatprep.subr.bf16.mxu0 0
        %705 = vmatpush1.bf16.msra.mxu0 0
        %706 = vmatprep.subr.bf16.mxu0 0
        %707 = vmatpush1.bf16.msra.mxu0 0
        %708 = vmatprep.subr.bf16.mxu0 0
        %709 = vmatpush1.bf16.msra.mxu0 0
        %710 = vmatprep.subr.bf16.mxu0 0
        %711 = vmatpush1.bf16.msra.mxu0 0
        %712 = vmatprep.subr.bf16.mxu0 0
        %713 = vmatpush1.bf16.msra.mxu0 0
        %714 = vmatprep.subr.bf16.mxu0 0
        %715 = vmatpush1.bf16.msra.mxu0 %v672
        %716 = vmatprep.subr.bf16.mxu0 0
        %717 = vmatpush1.bf16.msra.mxu0 %v671
        %718 = vmatprep.subr.bf16.mxu0 0
        %719 = vmatpush2.bf16.msra.mxu0 0
        %720 = vmatprep.subr.bf16.mxu0 0
        %721 = vmatpush2.bf16.msra.mxu0 0
        %722 = vmatprep.subr.bf16.mxu0 0
        %723 = vmatpush2.bf16.msra.mxu0 0
        %724 = vmatprep.subr.bf16.mxu0 0
        %725 = vmatpush2.bf16.msra.mxu0 0
        %726 = vmatprep.subr.bf16.mxu0 0
        %727 = vmatpush2.bf16.msra.mxu0 0
        %728 = vmatprep.subr.bf16.mxu0 0
        %729 = vmatpush2.bf16.msra.mxu0 0
        %730 = vmatprep.subr.bf16.mxu0 0
        %731 = vmatpush2.bf16.msra.mxu0 0
        %732 = vmatprep.subr.bf16.mxu0 0
        %733 = vmatpush2.bf16.msra.mxu0 0
        %734 = vmatprep.mubr.bf16.mxu0 0
        %735 = vmatmul.mubr.bf16.gmra.mxu0 %v700
        %v736 = vpop.f32.mrf.mxu0
        %v737 = vadd.f32 %v696, %v736
        %v738 = vpop.f32.mrf.mxu0
        %v739 = vpop.f32.mrf.mxu0
        %v740 = vpop.f32.mrf.mxu0
        %741 = vdwg.mxu0
        %v742 = vadd.f32 %v662, %v737
        %743 = vst [vmem:[#allocation2] sm:$0xff] %v742
        // Predicated region
        $region57: #{tpu_custom_call.1} parent=35 // pred_check
          %p744 = pneg %p331
        $region58: #{tpu_custom_call.1} parent=35 // pred_check_branch
          %746 = sbr.rel (%p744) target = $region60
        $region59: #{tpu_custom_call.1} parent=35 // pred_region
          %v747 = vld [vmem:[#allocation2] sm:$0xff]
          %v748 = vld [vmem:[%s292] sm:$0xff]
          %v749 = vadd.f32 %v747, %v748
          %750 = vst [vmem:[%s326] sm:$0xff] %v749
        $region60: #{tpu_custom_call.1} parent=35 // pred_fallthru
          _
        %s751 = sand.u32 %s150, 1
        %s752 = scalar_lea.sflag [#allocation5], %s751
        %s753 = sand.u32 %s150, 1
        %s754 = smul.addr %s753, 8
        %s755 = scalar_lea.vmem [#allocation10], %s754
        // Predicated region
        $region61: #{tpu_custom_call.1} parent=35 // pred_check
          %p756 = pneg %p160
        $region62: #{tpu_custom_call.1} parent=35 // pred_check_branch
          %758 = sbr.rel (%p756) target = $region64
        $region63: #{tpu_custom_call.1} parent=35 // pred_region
          %s760 = ssub.s32 128, 128
          %761 = vsyncadd %s752, %s760
          %s762 = smul.addr %s26, 128
          %s763 = scalar_lea.hbm %s4, %s762
          %s765 = sshll.u32 %s755, 4
          %s766 = int_to_ptr.vmem [resolvable:$true] %s765
          %768 = dma.vmem_to_hbm [thread:$0]  %s766, 128, %s763, %s752
        $region64: #{tpu_custom_call.1} parent=35 // pred_fallthru
          _
      $region36: #{tpu_custom_call.1} parent=5 // pred_fallthru
        _
      %p769 = scmp.le.s32.totalorder 2, %s17
      // Predicated region
      $region65: #{tpu_custom_call.1} parent=5 // pred_check
        %p770 = pneg %p769
      $region66: #{tpu_custom_call.1} parent=5 // pred_check_branch
        %772 = sbr.rel (%p770) target = $region68
      $region67: #{tpu_custom_call.1} parent=5 // pred_region
        %s773 = ssub.s32 %s17, 2
        // Predicated region
        $region69: #{tpu_custom_call.1} parent=67 // pred_check
          %p774 = pneg %p166
        $region70: #{tpu_custom_call.1} parent=67 // pred_check_branch
          %776 = sbr.rel (%p774) target = $region72
        $region71: #{tpu_custom_call.1} parent=67 // pred_region
          %s777 = sand.u32 %s151, 1
          %s778 = scalar_lea.sflag [#allocation5], %s777
          %s779 = sand.u32 %s151, 1
          %s780 = smul.addr %s779, 8
          %s781 = scalar_lea.vmem [#allocation10], %s780
          %782 = dma.done %s778, 128
        $region72: #{tpu_custom_call.1} parent=67 // pred_fallthru
          _
      $region68: #{tpu_custom_call.1} parent=5 // pred_fallthru
        _
    $region6: #{tpu_custom_call.1} parent=1 // loop_footer
      %s21 = sadd.s32 1, %s17
    $region7: #{tpu_custom_call.1} parent=1 // loop_footer_branch
      %16 = sbr.rel target = $region3
    $region8: #{tpu_custom_call.1} parent=1 // loop_exit
      _
    %783 = vsyncpa [#allocation4], 1
    %s784 = scalar_lea.sflag [#allocation4], 1
    %785 = vsyncpa %s784, 1
    %786 = vsyncpa [#allocation7], 1
    %787 = vsyncpa [#allocation5], 1
    %s788 = scalar_lea.sflag [#allocation5], 1
    %789 = vsyncpa %s788, 1

</llo_original>
